<compile_context>
chip_gen: v7x
topology: tpu7x:2x2x1
jax: 0.10.0
libtpu: 0.0.40
codegen_flags: <defaults>
</compile_context>

<pallas_src>
import jax
import jax.numpy as jnp
from jax.experimental import pallas as pl
from jax.experimental.pallas import tpu as pltpu


def _round_up(x, m):
    return ((x + m - 1) // m) * m


def _linear_kernel(x_ref, wt_ref, b_ref, o_ref):
    # x_ref:  (tm, D_in)        bf16 (or f32) batch tile
    # wt_ref: (D_in, D_out_pad) bf16 (or f32) transposed weight, resident
    # b_ref:  (1, D_out_pad)    f32 bias row
    # o_ref:  (tm, D_out_pad)   f32 output tile (lane-dense last dim)
    acc = jnp.dot(x_ref[...], wt_ref[...], preferred_element_type=jnp.float32)
    o_ref[...] = (acc + b_ref[...]).astype(o_ref.dtype)


def _choose_tm(n, d_in, d_out_p, x_itemsize, out_itemsize,
               max_tm=512, vmem_budget=12 * 1024 * 1024):
    """Largest multiple-of-8 row tile (<= max_tm) fitting a conservative VMEM
    budget that is safe even under v5e's 16 MiB default scoped limit."""
    # weight + bias are double-buffered by default (constant index -> no re-DMA,
    # but buffers are still reserved); x / out tiles are double-buffered too.
    fixed = 2 * d_in * d_out_p * x_itemsize + 2 * d_out_p * 4
    per_row = 2 * (d_in * x_itemsize + d_out_p * out_itemsize)
    tm = max(8, min(max_tm, (vmem_budget - fixed) // per_row))
    tm = (tm // 8) * 8

    n_pad8 = _round_up(max(n, 8), 8)
    tm = min(tm, n_pad8)

    # Prefer >= 2 grid steps for big batches so megacore (v7x) can split the
    # batch-parallel axis across both TensorCores.
    if n_pad8 > 256 and tm >= n_pad8:
        tm = _round_up(pl.cdiv(n_pad8, 2), 8)
    return tm


def prepare_densenet_cxr_top_params(w, b, *, compute_dtype=jnp.bfloat16):
    """One-time weight prep (hoisted out of the per-call path).

    w: [D_out, D_in] PyTorch Linear weight layout
    b: [D_out]
    returns: (W^T zero-padded to [D_in, round_up(D_out,128)] in compute_dtype,
              bias row [1, round_up(D_out,128)] in f32)
    """
    d_out, d_in = w.shape
    d_out_p = _round_up(d_out, 128)
    wt = jnp.transpose(w).astype(compute_dtype)                    # [D_in, D_out]
    wt = jnp.pad(wt, ((0, 0), (0, d_out_p - d_out)))               # lane-dense cols
    b_row = jnp.pad(b.astype(jnp.float32), (0, d_out_p - d_out))
    return wt, b_row.reshape(1, d_out_p)


def densenet_cxr_top_forward(x, wt_p, b_row, d_out, *,
                             compute_dtype=jnp.bfloat16, out_dtype=None):
    """y = x @ w.T + b with prepared (transposed / padded) parameters.

    x:     [N, D_in]
    wt_p:  [D_in, D_out_pad] (from prepare_densenet_cxr_top_params)
    b_row: [1, D_out_pad]
    d_out: true number of output classes
    returns: [N, d_out] in out_dtype (defaults to x.dtype)
    """
    n, d_in = x.shape
    d_in_w, d_out_p = wt_p.shape
    assert d_in == d_in_w, "feature dim mismatch"
    assert d_out <= d_out_p
    out_dtype = out_dtype or x.dtype

    x_itemsize = jnp.dtype(compute_dtype).itemsize
    out_itemsize = jnp.dtype(out_dtype).itemsize
    tm = _choose_tm(n, d_in, d_out_p, x_itemsize, out_itemsize)

    # Pad the batch so the cdiv grid uses full tiles (zero rows are sliced off).
    n_pad = pl.cdiv(max(n, 8), tm) * tm
    x_c = x.astype(compute_dtype)
    if n_pad != n:
        x_c = jnp.pad(x_c, ((0, n_pad - n), (0, 0)))
    grid = (n_pad // tm,)

    cost = pl.CostEstimate(
        flops=2 * n_pad * d_in * d_out_p,
        transcendentals=0,
        bytes_accessed=(n_pad * d_in * x_itemsize
                        + d_in * d_out_p * wt_p.dtype.itemsize
                        + n_pad * d_out_p * out_itemsize),
    )

    out = pl.pallas_call(
        _linear_kernel,
        out_shape=jax.ShapeDtypeStruct((n_pad, d_out_p), out_dtype),
        grid_spec=pltpu.PrefetchScalarGridSpec(
            num_scalar_prefetch=0,
            grid=grid,
            in_specs=[
                # batch tile marches along grid axis 0
                pl.BlockSpec((tm, d_in), lambda i: (i, 0)),
                # weight + bias: constant block index -> resident, not re-DMA'd
                pl.BlockSpec((d_in, d_out_p), lambda i: (0, 0)),
                pl.BlockSpec((1, d_out_p), lambda i: (0, 0)),
            ],
            out_specs=pl.BlockSpec((tm, d_out_p), lambda i: (i, 0)),
        ),
        compiler_params=pltpu.CompilerParams(
            dimension_semantics=("parallel",),
            vmem_limit_bytes=32 * 1024 * 1024,
        ),
        cost_estimate=cost,
    )(x_c, wt_p, b_row)

    return out[:n, :d_out]


def densenet_cxr_top(x, w, b, *, compute_dtype=jnp.bfloat16):
    """Convenience one-shot wrapper matching DensenetCXRTop.forward."""
    wt_p, b_row = prepare_densenet_cxr_top_params(w, b, compute_dtype=compute_dtype)
    return densenet_cxr_top_forward(x, wt_p, b_row, w.shape[0],
                                    compute_dtype=compute_dtype)


if __name__ == "__main__":
    # Small, DenseNet-head-like shapes: batch=8, in_features=32, out_classes=16.
    N, D_IN, D_OUT = 8, 32, 16

    key = jax.random.PRNGKey(0)
    kx, kw, kb = jax.random.split(key, 3)
    x = jax.random.normal(kx, (N, D_IN), dtype=jnp.float32)
    # Deterministic synthetic fc_0 parameters (PyTorch layout [out, in]).
    w = jax.random.normal(kw, (D_OUT, D_IN), dtype=jnp.float32) * 0.05
    b = jax.random.normal(kb, (D_OUT,), dtype=jnp.float32) * 0.01

    # Hoisted one-time parameter prep, then the kernel call.
    wt_p, b_row = prepare_densenet_cxr_top_params(w, b)
    out = densenet_cxr_top_forward(x, wt_p, b_row, D_OUT)
    out = jax.block_until_ready(out)
    assert out.shape == (N, D_OUT)

    # Reference at matching precision (bf16 inputs, f32 accumulation).
    x_bf = x.astype(jnp.bfloat16).astype(jnp.float32)
    w_bf = w.astype(jnp.bfloat16).astype(jnp.float32)
    ref = x_bf @ w_bf.T + b
    assert jnp.allclose(out, ref, atol=1e-2, rtol=1e-2), "mismatch vs bf16 reference"

    # Looser sanity check against the pure-f32 nn.Linear reference.
    ref32 = x @ w.T + b
    assert jnp.allclose(out, ref32, atol=5e-2, rtol=5e-2), "mismatch vs f32 reference"

    print("KERNEL_OK")
</pallas_src>

<mosaic_0001>
module attributes {stable_mosaic.version = 11 : i64} {
  func.func @_linear_kernel(%arg0: i32, %arg1: memref<8x32xbf16, #tpu.memory_space<vmem>>, %arg2: memref<32x128xbf16, #tpu.memory_space<vmem>>, %arg3: memref<1x128xf32, #tpu.memory_space<vmem>>, %arg4: memref<8x128xf32, #tpu.memory_space<vmem>>) attributes {dimension_semantics = [#tpu.dimension_semantics<parallel>], iteration_bounds = array<i64: 1>, scalar_prefetch = 0 : i64, scratch_operands = 0 : i64, tpu.core_type = #tpu.core_type<tc>, window_params = [{transform_indices = @transform_0, window_bounds = array<i64: 8, 32>}, {pipeline_mode = #tpu.pipeline_mode<synchronous>, transform_indices = @transform_1, window_bounds = array<i64: 32, 128>}, {pipeline_mode = #tpu.pipeline_mode<synchronous>, transform_indices = @transform_2, window_bounds = array<i64: 1, 128>}, {transform_indices = @transform_3, window_bounds = array<i64: 8, 128>}]} {
    %c0 = arith.constant 0 : index
    %c0_0 = arith.constant 0 : index
    %0 = vector.load %arg1[%c0, %c0_0] : memref<8x32xbf16, #tpu.memory_space<vmem>>, vector<8x32xbf16>
    %c0_1 = arith.constant 0 : index
    %c0_2 = arith.constant 0 : index
    %1 = vector.load %arg2[%c0_1, %c0_2] : memref<32x128xbf16, #tpu.memory_space<vmem>>, vector<32x128xbf16>
    %cst = arith.constant dense<0.000000e+00> : vector<8x128xf32>
    %2 = tpu.matmul %0, %1, %cst {dimension_numbers = #tpu.dot_dimension_numbers<[1], [0], [0], [1], [0, 0, 1, 1], [], []>} : vector<8x32xbf16>, vector<32x128xbf16>, vector<8x128xf32> -> vector<8x128xf32>
    %c0_3 = arith.constant 0 : index
    %c0_4 = arith.constant 0 : index
    %3 = vector.load %arg3[%c0_3, %c0_4] : memref<1x128xf32, #tpu.memory_space<vmem>>, vector<1x128xf32>
    %4 = vector.broadcast %3 : vector<1x128xf32> to vector<8x128xf32>
    %5 = arith.addf %2, %4 : vector<8x128xf32>
    %c0_5 = arith.constant 0 : index
    %c0_6 = arith.constant 0 : index
    %6 = vector.load %arg4[%c0_5, %c0_6] : memref<8x128xf32, #tpu.memory_space<vmem>>, vector<8x128xf32>
    tpu.vector_store %arg4[%c0_5, %c0_6], %5 {strides = array<i32>} : memref<8x128xf32, #tpu.memory_space<vmem>>, vector<8x128xf32>,
    return
  }
  func.func @transform_0(%arg0: i32) -> (i32, i32) {
    %c0_i32 = arith.constant 0 : i32
    %c0_i32_0 = arith.constant 0 : i32
    return %arg0, %c0_i32 : i32, i32
  }
  func.func @transform_1(%arg0: i32) -> (i32, i32) {
    %c0_i32 = arith.constant 0 : i32
    %c0_i32_0 = arith.constant 0 : i32
    %c0_i32_1 = arith.constant 0 : i32
    return %c0_i32, %c0_i32_0 : i32, i32
  }
  func.func @transform_2(%arg0: i32) -> (i32, i32) {
    %c0_i32 = arith.constant 0 : i32
    %c0_i32_0 = arith.constant 0 : i32
    %c0_i32_1 = arith.constant 0 : i32
    return %c0_i32, %c0_i32_0 : i32, i32
  }
  func.func @transform_3(%arg0: i32) -> (i32, i32) {
    %c0_i32 = arith.constant 0 : i32
    %c0_i32_0 = arith.constant 0 : i32
    return %arg0, %c0_i32 : i32, i32
  }
}

</mosaic_0001>

<llo_original>
// kernel: tpu_custom_call.1
$region0: #{tpu_custom_call.1}
  #allocation0 [shape = 'u32[]', space=smem, size = 0x4, offset = 0x4, fixed_abs, tag = 'smem constant byte address 0x4 - core index']
  #allocation1 [shape = 'u32[144,128]{1,0:T(1,128)}', space=vmem, size = 0x12000, scoped, tag = 'internal scratch']
  %s0 = inlined_call_operand.hbm [shape: bf16[8,32], index: 0, kind: input, shape index: {}]
  %s1 = inlined_call_operand.hbm [shape: bf16[32,128], index: 1, kind: input, shape index: {}]
  %s2 = inlined_call_operand.vmem [shape: f32[1,128], index: 2, kind: input, shape index: {}]
  %s3 = inlined_call_operand.hbm [shape: f32[8,128], index: 3, kind: output, shape index: {}]
  %s4 = sld [smem:[#allocation0]]
  $region30: #{tpu_custom_call.1} parent=0
    _
  %s6 = ssub.s32 1, %s4
  %s7 = scalar_select 0, %s6, %s4
  $region1: #{tpu_custom_call.1} parent=0
    #allocation2 [shape = 'u8[2048]{0}', space=vmem, size = 0x800, scoped, tag = 'input window, operand 0, single buffered']
    #allocation3 [shape = 's32[1]{0}', space=sflag, size = 0x4, scoped, tag = 'scoped memory for tpu_custom_call.1']
    #allocation4 [shape = 's32[1]{0}', space=sflag, size = 0x4, scoped, tag = 'scoped memory for tpu_custom_call.1']
    #allocation5 [shape = 'u8[8192]{0}', space=vmem, size = 0x2000, scoped, tag = 'input window, operand 1, single buffered']
    #allocation6 [shape = 's32[1]{0}', space=sflag, size = 0x4, scoped, tag = 'scoped memory for tpu_custom_call.1']
    #allocation7 [shape = 'u8[4096]{0}', space=vmem, size = 0x1000, scoped, tag = 'output window, operand 0, single buffered']
    %8 = vsyncpa [#allocation3], 0
    %9 = vsyncpa [#allocation6], 0
    %10 = vsyncpa [#allocation4], 0
    // Predicated region
    $region2: #{tpu_custom_call.1} parent=1 // pred_check
      _
    $region3: #{tpu_custom_call.1} parent=1 // pred_check_branch
      %12 = sbr.rel (0) target = $region5
    $region4: #{tpu_custom_call.1} parent=1 // pred_region
      %s14 = ssub.s32 64, 64
      %15 = vsyncadd [#allocation3], %s14
      %s17 = sshll.u32 [#allocation2], 4
      %s18 = int_to_ptr.vmem [resolvable:$true] %s17
      %20 = dma.hbm_to_vmem [thread:$0]  %s0, 64, %s18, [#allocation3]
    $region5: #{tpu_custom_call.1} parent=1 // pred_fallthru
      _
    // Predicated region
    $region6: #{tpu_custom_call.1} parent=1 // pred_check
      _
    $region7: #{tpu_custom_call.1} parent=1 // pred_check_branch
      %22 = sbr.rel (0) target = $region9
    $region8: #{tpu_custom_call.1} parent=1 // pred_region
      %s24 = ssub.s32 256, 256
      %25 = vsyncadd [#allocation6], %s24
      %s26 = sshll.u32 [#allocation5], 4
      %s27 = int_to_ptr.vmem [resolvable:$true] %s26
      %32 = dma.hbm_to_vmem [thread:$0]  %s1, 256, %s27, [#allocation6], 64, 64, 4
    $region9: #{tpu_custom_call.1} parent=1 // pred_fallthru
      _
    // Predicated region
    $region10: #{tpu_custom_call.1} parent=1 // pred_check
      _
    $region11: #{tpu_custom_call.1} parent=1 // pred_check_branch
      %34 = sbr.rel (0) target = $region13
    $region12: #{tpu_custom_call.1} parent=1 // pred_region
      _
    $region13: #{tpu_custom_call.1} parent=1 // pred_fallthru
      _
    // Predicated region
    $region14: #{tpu_custom_call.1} parent=1 // pred_check
      _
    $region15: #{tpu_custom_call.1} parent=1 // pred_check_branch
      %36 = sbr.rel (0) target = $region17
    $region16: #{tpu_custom_call.1} parent=1 // pred_region
      %37 = dma.done [#allocation3], 64
    $region17: #{tpu_custom_call.1} parent=1 // pred_fallthru
      _
    // Predicated region
    $region18: #{tpu_custom_call.1} parent=1 // pred_check
      _
    $region19: #{tpu_custom_call.1} parent=1 // pred_check_branch
      %39 = sbr.rel (0) target = $region21
    $region20: #{tpu_custom_call.1} parent=1 // pred_region
      %40 = dma.done [#allocation6], 256
    $region21: #{tpu_custom_call.1} parent=1 // pred_fallthru
      _
    %v42 = vld [vmem:[#allocation2] sm:$0xf]
    %v43 = vld [vmem:[#allocation5] sm:$0xf]
    %v44 = vld [vmem:[#allocation5 + $0x4] sm:$0xf]
    %v45 = vld [vmem:[#allocation5 + $0x8] sm:$0xf]
    %v46 = vld [vmem:[#allocation5 + $0xc] sm:$0xf]
    %v47 = vld [vmem:[%s2] sm:$0x1]
    %v49 = vlaneseq
    %v50 = vshrl.u32 %v49, 7
    %v51 = vsub.s32 0, %v50
    %v52 = vrot.slane %v47, %v51
    %v58 = vunpack.c.l.b16 %v43
    %v59 = vunpack.c.l.b16 %v44
    %v60 = vunpack.c.l.b16 %v45
    %v61 = vunpack.c.l.b16 %v46
    %v62 = vpack.c.b16 %v59, %v58
    %v63 = vpack.c.b16 %v61, %v60
    %vm66 = vcmask 261120
    %v68 = vsel %vm66, %v42, 0
    %70 = vmatprep.subr.bf16.mxu0 0
    %71 = vmatpush1.bf16.msra.mxu0 %v62
    %72 = vmatprep.subr.bf16.mxu0 0
    %73 = vmatpush1.bf16.msra.mxu0 %v63
    %74 = vmatprep.subr.bf16.mxu0 0
    %75 = vmatpush1.bf16.msra.mxu0 0
    %76 = vmatprep.subr.bf16.mxu0 0
    %77 = vmatpush1.bf16.msra.mxu0 0
    %78 = vmatprep.subr.bf16.mxu0 0
    %79 = vmatpush1.bf16.msra.mxu0 0
    %80 = vmatprep.subr.bf16.mxu0 0
    %81 = vmatpush1.bf16.msra.mxu0 0
    %82 = vmatprep.subr.bf16.mxu0 0
    %83 = vmatpush1.bf16.msra.mxu0 0
    %84 = vmatprep.subr.bf16.mxu0 0
    %85 = vmatpush1.bf16.msra.mxu0 0
    %86 = vmatprep.subr.bf16.mxu0 0
    %87 = vmatpush1.bf16.msra.mxu0 0
    %88 = vmatprep.subr.bf16.mxu0 0
    %89 = vmatpush1.bf16.msra.mxu0 0
    %90 = vmatprep.subr.bf16.mxu0 0
    %91 = vmatpush1.bf16.msra.mxu0 0
    %92 = vmatprep.subr.bf16.mxu0 0
    %93 = vmatpush1.bf16.msra.mxu0 0
    %94 = vmatprep.subr.bf16.mxu0 0
    %95 = vmatpush1.bf16.msra.mxu0 0
    %96 = vmatprep.subr.bf16.mxu0 0
    %97 = vmatpush1.bf16.msra.mxu0 0
    %98 = vmatprep.subr.bf16.mxu0 0
    %99 = vmatpush1.bf16.msra.mxu0 0
    %100 = vmatprep.subr.bf16.mxu0 0
    %101 = vmatpush1.bf16.msra.mxu0 0
    %102 = vmatprep.mubr.bf16.mxu0 0
    %103 = vmatmul.mubr.bf16.gmra.mrb[0].mxu0 %v68
    %v104 = vpop.f32.mrb[0].mxu0
    %v105 = vadd.f32 %v52, %v104
    %v106 = vpop.f32.mrb[0].mxu0
    %v107 = vpop.f32.mrb[0].mxu0
    %v108 = vpop.f32.mrb[0].mxu0
    %109 = vdwg.mxu0
    %110 = vst [vmem:[#allocation7] sm:$0xff] %v105
    // Predicated region
    $region22: #{tpu_custom_call.1} parent=1 // pred_check
      _
    $region23: #{tpu_custom_call.1} parent=1 // pred_check_branch
      %112 = sbr.rel (0) target = $region25
    $region24: #{tpu_custom_call.1} parent=1 // pred_region
      %s114 = ssub.s32 128, 128
      %115 = vsyncadd [#allocation4], %s114
      %s117 = sshll.u32 [#allocation7], 4
      %s118 = int_to_ptr.vmem [resolvable:$true] %s117
      %120 = dma.vmem_to_hbm [thread:$0]  %s118, 128, %s3, [#allocation4]
    $region25: #{tpu_custom_call.1} parent=1 // pred_fallthru
      _
    // Predicated region
    $region26: #{tpu_custom_call.1} parent=1 // pred_check
      _
    $region27: #{tpu_custom_call.1} parent=1 // pred_check_branch
      %122 = sbr.rel (0) target = $region29
    $region28: #{tpu_custom_call.1} parent=1 // pred_region
      %123 = dma.done [#allocation4], 128
    $region29: #{tpu_custom_call.1} parent=1 // pred_fallthru
      _
    %124 = vsyncpa [#allocation3], 1
    %125 = vsyncpa [#allocation6], 1
    %126 = vsyncpa [#allocation4], 1

</llo_original>
